<compile_context>
chip_gen: v7x
topology: tpu7x:2x2x1
jax: 0.10.0
libtpu: 0.0.40
codegen_flags: <defaults>
</compile_context>

<pallas_src>
import functools

import jax
import jax.numpy as jnp
from jax.experimental import pallas as pl
from jax.experimental.pallas import tpu as pltpu


def _vsgc_kernel(x_ref, wt_ref, b_ref, a_hbm, o_ref,
                 a_res, h1, stage, sem, *,
                 num_layers, alpha, lambd, tn):
    n = a_res.shape[0]
    n_chunks = n // tn
    n_slots = stage.shape[0]

    inv = 1.0 / (lambd + alpha)
    lam_scale = jnp.float32(lambd * inv)

    copies = [None] * n_slots

    def start_fetch(c):
        slot = c % n_slots
        cp = pltpu.make_async_copy(
            a_hbm.at[:, c * tn:(c + 1) * tn], stage.at[slot], sem.at[slot])
        cp.start()
        copies[slot] = cp

    # Kick off the first A column-chunk DMA before the transform matmul so the
    # transform (and the chunked layer-1 compute) hides the A load.
    start_fetch(0)

    # Pre-transform in transposed layout: h0^T = W^T @ X^T + b.
    # bf16 operands (cast in-kernel), f32 MXU accumulation.
    wt_bf = wt_ref[...].astype(jnp.bfloat16)          # (C_pad, F)
    x_bf = x_ref[...].astype(jnp.bfloat16)            # (N, F)
    h0 = jnp.dot(wt_bf, x_bf.T, preferred_element_type=jnp.float32)
    h0 = h0 + b_ref[...]                              # (C_pad, 1) broadcast over lanes
    h0_scaled = jnp.float32(alpha * inv) * h0         # hoisted loop invariant
    h0_bf16 = h0.astype(jnp.bfloat16)

    # Layer 1: consume A column chunks as they land.  Each f32 chunk is scaled
    # by lambd/(lambd+alpha) and cast to bf16 in-kernel, written to the
    # resident copy (used by layers 2..K), and immediately used for the
    # layer-1 partial matmul while the next chunk's DMA is in flight.
    for c in range(n_chunks):
        slot = c % n_slots
        if c + 1 < n_chunks:
            start_fetch(c + 1)
        copies[slot].wait()
        sl = slice(c * tn, (c + 1) * tn)
        a_res[:, sl] = (lam_scale * stage[slot]).astype(jnp.bfloat16)
        # prop^T[:, chunk] = h0^T @ A[:, chunk]   (A symmetric; scale folded in)
        h1[:, sl] = jnp.dot(h0_bf16, a_res[:, sl],
                            preferred_element_type=jnp.float32)
    h = h1[...] + h0_scaled

    # Layers 2..K on the resident, pre-scaled bf16 A.  num_layers is a
    # compile-time constant -> fully unrolled.
    for _ in range(num_layers - 1):
        prop = jnp.dot(h.astype(jnp.bfloat16), a_res[...],
                       preferred_element_type=jnp.float32)
        h = prop + h0_scaled

    o_ref[...] = h.astype(o_ref.dtype)


def _pick_chunk(n):
    """Column-chunk width for streaming A (lane-aligned when possible)."""
    for tn in (256, 128):
        if n % tn == 0 and n // tn >= 2:
            return tn
    return n


def _vmem_limit_bytes():
    """Per-generation VMEM budget with headroom (v5e/v6e 128 MiB, v7x 64 MiB)."""
    try:
        cap = pltpu.get_tpu_info().vmem_capacity_bytes
    except Exception:  # older runtimes / interpret mode
        cap = 64 * 1024 * 1024
    return int(min(cap * 0.85, 112 * 1024 * 1024))


def vsgc_net_pre(a_hat, x, w, b, *, num_layers=3, alpha=1.0, lambd=1.0):
    """a_hat: (N, N) SYMMETRIC normalized adjacency; x: (N, F); w: (F, C); b: (C,).

    Returns (N, C) float32, matching the PyTorch module output layout.
    """
    assert num_layers >= 1
    n, f = x.shape
    c = w.shape[1]
    c_pad = ((c + 15) // 16) * 16            # pad classes to the bf16 sublane tile

    # Tiny, tile-aligned transform weights; padded rows are zero so padded
    # output rows are exactly zero and sliced off below.
    wt_pad = jnp.zeros((c_pad, f), jnp.float32).at[:c, :].set(
        w.astype(jnp.float32).T)
    b_pad = jnp.zeros((c_pad, 1), jnp.float32).at[:c, 0].set(
        b.astype(jnp.float32))

    tn = _pick_chunk(n)
    n_chunks = n // tn
    n_slots = 2 if n_chunks > 1 else 1

    kernel = functools.partial(
        _vsgc_kernel,
        num_layers=int(num_layers),
        alpha=float(alpha),
        lambd=float(lambd),
        tn=tn,
    )

    vmem_spec = pl.BlockSpec(memory_space=pltpu.MemorySpace.VMEM)
    any_spec = pl.BlockSpec(memory_space=pl.ANY)   # A stays in HBM; DMA'd in-kernel

    out_t = pl.pallas_call(
        kernel,
        out_shape=jax.ShapeDtypeStruct((c_pad, n), jnp.float32),
        in_specs=[vmem_spec, vmem_spec, vmem_spec, any_spec],
        out_specs=vmem_spec,
        scratch_shapes=[
            pltpu.VMEM((n, n), jnp.bfloat16),            # resident scaled A
            pltpu.VMEM((c_pad, n), jnp.float32),         # layer-1 prop columns
            pltpu.VMEM((n_slots, n, tn), jnp.float32),   # f32 staging (double buffer)
            pltpu.SemaphoreType.DMA((n_slots,)),
        ],
        compiler_params=pltpu.CompilerParams(
            vmem_limit_bytes=_vmem_limit_bytes(),
        ),
    )(x.astype(jnp.float32), wt_pad, b_pad, a_hat.astype(jnp.float32))

    return out_t[:c, :].T                          # back to (N, C)


def build_normalized_adjacency(key, n):
    """Deterministic small random undirected graph -> D~^-1/2 (A+I) D~^-1/2."""
    probs = jax.random.uniform(key, (n, n))
    a = (probs < 0.3).astype(jnp.float32)
    a = jnp.maximum(a, a.T)                        # symmetric
    a = a * (1.0 - jnp.eye(n, dtype=jnp.float32))  # no self loops yet
    a_tilde = a + jnp.eye(n, dtype=jnp.float32)    # add self loops
    deg = jnp.sum(a_tilde, axis=1)
    d_inv_sqrt = 1.0 / jnp.sqrt(deg)
    return a_tilde * d_inv_sqrt[:, None] * d_inv_sqrt[None, :]


def reference_vsgc(a_hat, x, w, b, num_layers, alpha, lambd):
    h0 = x @ w + b[None, :]
    h = h0
    for _ in range(num_layers):
        h = (lambd * (a_hat @ h) + alpha * h0) / (lambd + alpha)
    return h


if __name__ == "__main__":
    key = jax.random.PRNGKey(0)
    k_graph, k_x, k_w, k_b = jax.random.split(key, 4)

    # Small shapes consistent with the module; N chosen so the double-buffered
    # chunked A streaming path (2 chunks of 128 columns) is exercised.
    num_nodes = 256
    num_feats = 32
    num_classes = 4
    num_layers = 3
    alpha = 1.0
    lambd = 1.0

    a_hat = build_normalized_adjacency(k_graph, num_nodes)
    x = jax.random.normal(k_x, (num_nodes, num_feats), dtype=jnp.float32)
    # nn.Linear(num_feats, num_classes): weight (out,in); we store transposed (in,out).
    w = jax.random.normal(k_w, (num_feats, num_classes), dtype=jnp.float32) * 0.1
    b = jax.random.normal(k_b, (num_classes,), dtype=jnp.float32) * 0.1

    out = vsgc_net_pre(a_hat, x, w, b,
                       num_layers=num_layers, alpha=alpha, lambd=lambd)
    out = jax.block_until_ready(out)

    ref = reference_vsgc(a_hat, x, w, b, num_layers, alpha, lambd)
    assert out.shape == (num_nodes, num_classes)
    # bf16 MXU operands with f32 accumulation -> loosened tolerance (documented).
    err = float(jnp.max(jnp.abs(out - ref)))
    assert jnp.allclose(out, ref, atol=3e-2, rtol=3e-2), err

    print("KERNEL_OK")
</pallas_src>

<mosaic_0001>
module attributes {stable_mosaic.version = 11 : i64} {
  func.func @_vsgc_kernel(%arg0: memref<256x32xf32, #tpu.memory_space<vmem>>, %arg1: memref<16x32xf32, #tpu.memory_space<vmem>>, %arg2: memref<16x1xf32, #tpu.memory_space<vmem>>, %arg3: memref<256x256xf32, #tpu.memory_space<any>>, %arg4: memref<16x256xf32, #tpu.memory_space<vmem>>, %arg5: memref<256x256xbf16, #tpu.memory_space<vmem>>, %arg6: memref<16x256xf32, #tpu.memory_space<vmem>>, %arg7: memref<2x256x128xf32, #tpu.memory_space<vmem>>, %arg8: memref<2x!tpu.dma_semaphore, #tpu.memory_space<semaphore_mem>>) attributes {dimension_semantics = [], scalar_prefetch = 0 : i64, scratch_operands = 4 : i64, tpu.core_type = #tpu.core_type<tc>} {
    %c0_i32 = arith.constant 0 : i32
    %c0_i32_0 = arith.constant 0 : i32
    %c0_i32_1 = arith.constant 0 : i32
    %c0_i32_2 = arith.constant 0 : i32
    %0 = tpu.memref_slice %arg3[%c0_i32_1, %c0_i32_2] : memref<256x256xf32, #tpu.memory_space<any>> -> memref<256x128xf32, #tpu.memory_space<any>>
    %c0_i32_3 = arith.constant 0 : i32
    %c0_i32_4 = arith.constant 0 : i32
    %1 = tpu.memref_slice %arg7[%c0_i32, %c0_i32_3, %c0_i32_4] : memref<2x256x128xf32, #tpu.memory_space<vmem>> -> memref<1x256x128xf32, #tpu.memory_space<vmem>>
    %2 = tpu.memref_squeeze %1 : memref<1x256x128xf32, #tpu.memory_space<vmem>> -> memref<256x128xf32, #tpu.memory_space<vmem>>
    %3 = tpu.memref_slice %arg8[%c0_i32_0] : memref<2x!tpu.dma_semaphore, #tpu.memory_space<semaphore_mem>> -> memref<1x!tpu.dma_semaphore, #tpu.memory_space<semaphore_mem>>
    %4 = tpu.memref_squeeze %3 : memref<1x!tpu.dma_semaphore, #tpu.memory_space<semaphore_mem>> -> memref<!tpu.dma_semaphore, #tpu.memory_space<semaphore_mem>>
    tpu.enqueue_dma source(%0 : memref<256x128xf32, #tpu.memory_space<any>>) target(%2 : memref<256x128xf32, #tpu.memory_space<vmem>>) target_semaphore(%4 : memref<!tpu.dma_semaphore, #tpu.memory_space<semaphore_mem>>)
    %c0 = arith.constant 0 : index
    %c0_5 = arith.constant 0 : index
    %5 = vector.load %arg1[%c0, %c0_5] : memref<16x32xf32, #tpu.memory_space<vmem>>, vector<16x32xf32>
    %6 = arith.truncf %5 : vector<16x32xf32> to vector<16x32xbf16>
    %c0_6 = arith.constant 0 : index
    %c0_7 = arith.constant 0 : index
    %7 = vector.load %arg0[%c0_6, %c0_7] : memref<256x32xf32, #tpu.memory_space<vmem>>, vector<256x32xf32>
    %8 = arith.truncf %7 : vector<256x32xf32> to vector<256x32xbf16>
    %9 = tpu.transpose %8, [1, 0] : vector<256x32xbf16> -> vector<32x256xbf16>
    %cst = arith.constant dense<0.000000e+00> : vector<16x256xf32>
    %10 = tpu.matmul %6, %9, %cst {dimension_numbers = #tpu.dot_dimension_numbers<[1], [0], [0], [1], [0, 0, 1, 1], [], []>} : vector<16x32xbf16>, vector<32x256xbf16>, vector<16x256xf32> -> vector<16x256xf32>
    %c0_8 = arith.constant 0 : index
    %c0_9 = arith.constant 0 : index
    %11 = vector.load %arg2[%c0_8, %c0_9] : memref<16x1xf32, #tpu.memory_space<vmem>>, vector<16x1xf32>
    %12 = vector.broadcast %11 : vector<16x1xf32> to vector<16x256xf32>
    %13 = arith.addf %10, %12 : vector<16x256xf32>
    %cst_10 = arith.constant 5.000000e-01 : f32
    %14 = vector.broadcast %cst_10 : f32 to vector<16x256xf32>
    %15 = arith.mulf %14, %13 : vector<16x256xf32>
    %16 = arith.truncf %13 : vector<16x256xf32> to vector<16x256xbf16>
    %c1_i32 = arith.constant 1 : i32
    %c1_i32_11 = arith.constant 1 : i32
    %c0_i32_12 = arith.constant 0 : i32
    %c128_i32 = arith.constant 128 : i32
    %17 = tpu.memref_slice %arg3[%c0_i32_12, %c128_i32] : memref<256x256xf32, #tpu.memory_space<any>> -> memref<256x128xf32, #tpu.memory_space<any>>
    %c0_i32_13 = arith.constant 0 : i32
    %c0_i32_14 = arith.constant 0 : i32
    %18 = tpu.memref_slice %arg7[%c1_i32, %c0_i32_13, %c0_i32_14] : memref<2x256x128xf32, #tpu.memory_space<vmem>> -> memref<1x256x128xf32, #tpu.memory_space<vmem>>
    %19 = tpu.memref_squeeze %18 : memref<1x256x128xf32, #tpu.memory_space<vmem>> -> memref<256x128xf32, #tpu.memory_space<vmem>>
    %20 = tpu.memref_slice %arg8[%c1_i32_11] : memref<2x!tpu.dma_semaphore, #tpu.memory_space<semaphore_mem>> -> memref<1x!tpu.dma_semaphore, #tpu.memory_space<semaphore_mem>>
    %21 = tpu.memref_squeeze %20 : memref<1x!tpu.dma_semaphore, #tpu.memory_space<semaphore_mem>> -> memref<!tpu.dma_semaphore, #tpu.memory_space<semaphore_mem>>
    tpu.enqueue_dma source(%17 : memref<256x128xf32, #tpu.memory_space<any>>) target(%19 : memref<256x128xf32, #tpu.memory_space<vmem>>) target_semaphore(%21 : memref<!tpu.dma_semaphore, #tpu.memory_space<semaphore_mem>>)
    %c0_i32_15 = arith.constant 0 : i32
    %c0_i32_16 = arith.constant 0 : i32
    %c0_i32_17 = arith.constant 0 : i32
    %c0_i32_18 = arith.constant 0 : i32
    %22 = tpu.memref_slice %arg3[%c0_i32_17, %c0_i32_18] : memref<256x256xf32, #tpu.memory_space<any>> -> memref<256x128xf32, #tpu.memory_space<any>>
    %c0_i32_19 = arith.constant 0 : i32
    %c0_i32_20 = arith.constant 0 : i32
    %23 = tpu.memref_slice %arg7[%c0_i32_15, %c0_i32_19, %c0_i32_20] : memref<2x256x128xf32, #tpu.memory_space<vmem>> -> memref<1x256x128xf32, #tpu.memory_space<vmem>>
    %24 = tpu.memref_squeeze %23 : memref<1x256x128xf32, #tpu.memory_space<vmem>> -> memref<256x128xf32, #tpu.memory_space<vmem>>
    %25 = tpu.memref_slice %arg8[%c0_i32_16] : memref<2x!tpu.dma_semaphore, #tpu.memory_space<semaphore_mem>> -> memref<1x!tpu.dma_semaphore, #tpu.memory_space<semaphore_mem>>
    %26 = tpu.memref_squeeze %25 : memref<1x!tpu.dma_semaphore, #tpu.memory_space<semaphore_mem>> -> memref<!tpu.dma_semaphore, #tpu.memory_space<semaphore_mem>>
    tpu.wait_dma2 semaphore(%26 : memref<!tpu.dma_semaphore, #tpu.memory_space<semaphore_mem>>) src(%22 : memref<256x128xf32, #tpu.memory_space<any>>) dst(%24 : memref<256x128xf32, #tpu.memory_space<vmem>>)
    %c0_21 = arith.constant 0 : index
    %c0_22 = arith.constant 0 : index
    %c0_23 = arith.constant 0 : index
    %27 = vector.load %arg7[%c0_21, %c0_22, %c0_23] : memref<2x256x128xf32, #tpu.memory_space<vmem>>, vector<1x256x128xf32>
    %28 = vector.shape_cast %27 : vector<1x256x128xf32> to vector<256x128xf32>
    %cst_24 = arith.constant 5.000000e-01 : f32
    %29 = vector.broadcast %cst_24 : f32 to vector<256x128xf32>
    %30 = arith.mulf %29, %28 : vector<256x128xf32>
    %31 = arith.truncf %30 : vector<256x128xf32> to vector<256x128xbf16>
    %c0_25 = arith.constant 0 : index
    %c0_26 = arith.constant 0 : index
    %32 = vector.load %arg5[%c0_25, %c0_26] : memref<256x256xbf16, #tpu.memory_space<vmem>>, vector<256x128xbf16>
    tpu.vector_store %arg5[%c0_25, %c0_26], %31 {strides = array<i32>} : memref<256x256xbf16, #tpu.memory_space<vmem>>, vector<256x128xbf16>,
    %c0_27 = arith.constant 0 : index
    %c0_28 = arith.constant 0 : index
    %33 = vector.load %arg5[%c0_27, %c0_28] : memref<256x256xbf16, #tpu.memory_space<vmem>>, vector<256x128xbf16>
    %cst_29 = arith.constant dense<0.000000e+00> : vector<16x128xf32>
    %34 = tpu.matmul %16, %33, %cst_29 {dimension_numbers = #tpu.dot_dimension_numbers<[1], [0], [0], [1], [0, 0, 1, 1], [], []>} : vector<16x256xbf16>, vector<256x128xbf16>, vector<16x128xf32> -> vector<16x128xf32>
    %c0_30 = arith.constant 0 : index
    %c0_31 = arith.constant 0 : index
    %35 = vector.load %arg6[%c0_30, %c0_31] : memref<16x256xf32, #tpu.memory_space<vmem>>, vector<16x128xf32>
    tpu.vector_store %arg6[%c0_30, %c0_31], %34 {strides = array<i32>} : memref<16x256xf32, #tpu.memory_space<vmem>>, vector<16x128xf32>,
    %c1_i32_32 = arith.constant 1 : i32
    %c1_i32_33 = arith.constant 1 : i32
    %c0_i32_34 = arith.constant 0 : i32
    %c128_i32_35 = arith.constant 128 : i32
    %36 = tpu.memref_slice %arg3[%c0_i32_34, %c128_i32_35] : memref<256x256xf32, #tpu.memory_space<any>> -> memref<256x128xf32, #tpu.memory_space<any>>
    %c0_i32_36 = arith.constant 0 : i32
    %c0_i32_37 = arith.constant 0 : i32
    %37 = tpu.memref_slice %arg7[%c1_i32_32, %c0_i32_36, %c0_i32_37] : memref<2x256x128xf32, #tpu.memory_space<vmem>> -> memref<1x256x128xf32, #tpu.memory_space<vmem>>
    %38 = tpu.memref_squeeze %37 : memref<1x256x128xf32, #tpu.memory_space<vmem>> -> memref<256x128xf32, #tpu.memory_space<vmem>>
    %39 = tpu.memref_slice %arg8[%c1_i32_33] : memref<2x!tpu.dma_semaphore, #tpu.memory_space<semaphore_mem>> -> memref<1x!tpu.dma_semaphore, #tpu.memory_space<semaphore_mem>>
    %40 = tpu.memref_squeeze %39 : memref<1x!tpu.dma_semaphore, #tpu.memory_space<semaphore_mem>> -> memref<!tpu.dma_semaphore, #tpu.memory_space<semaphore_mem>>
    tpu.wait_dma2 semaphore(%40 : memref<!tpu.dma_semaphore, #tpu.memory_space<semaphore_mem>>) src(%36 : memref<256x128xf32, #tpu.memory_space<any>>) dst(%38 : memref<256x128xf32, #tpu.memory_space<vmem>>)
    %c1 = arith.constant 1 : index
    %c0_38 = arith.constant 0 : index
    %c0_39 = arith.constant 0 : index
    %41 = vector.load %arg7[%c1, %c0_38, %c0_39] : memref<2x256x128xf32, #tpu.memory_space<vmem>>, vector<1x256x128xf32>
    %42 = vector.shape_cast %41 : vector<1x256x128xf32> to vector<256x128xf32>
    %cst_40 = arith.constant 5.000000e-01 : f32
    %43 = vector.broadcast %cst_40 : f32 to vector<256x128xf32>
    %44 = arith.mulf %43, %42 : vector<256x128xf32>
    %45 = arith.truncf %44 : vector<256x128xf32> to vector<256x128xbf16>
    %c0_41 = arith.constant 0 : index
    %c128 = arith.constant 128 : index
    %46 = vector.load %arg5[%c0_41, %c128] : memref<256x256xbf16, #tpu.memory_space<vmem>>, vector<256x128xbf16>
    tpu.vector_store %arg5[%c0_41, %c128], %45 {strides = array<i32>} : memref<256x256xbf16, #tpu.memory_space<vmem>>, vector<256x128xbf16>,
    %c0_42 = arith.constant 0 : index
    %c128_43 = arith.constant 128 : index
    %47 = vector.load %arg5[%c0_42, %c128_43] : memref<256x256xbf16, #tpu.memory_space<vmem>>, vector<256x128xbf16>
    %cst_44 = arith.constant dense<0.000000e+00> : vector<16x128xf32>
    %48 = tpu.matmul %16, %47, %cst_44 {dimension_numbers = #tpu.dot_dimension_numbers<[1], [0], [0], [1], [0, 0, 1, 1], [], []>} : vector<16x256xbf16>, vector<256x128xbf16>, vector<16x128xf32> -> vector<16x128xf32>
    %c0_45 = arith.constant 0 : index
    %c128_46 = arith.constant 128 : index
    %49 = vector.load %arg6[%c0_45, %c128_46] : memref<16x256xf32, #tpu.memory_space<vmem>>, vector<16x128xf32>
    tpu.vector_store %arg6[%c0_45, %c128_46], %48 {strides = array<i32>} : memref<16x256xf32, #tpu.memory_space<vmem>>, vector<16x128xf32>,
    %c0_47 = arith.constant 0 : index
    %c0_48 = arith.constant 0 : index
    %50 = vector.load %arg6[%c0_47, %c0_48] : memref<16x256xf32, #tpu.memory_space<vmem>>, vector<16x256xf32>
    %51 = arith.addf %50, %15 : vector<16x256xf32>
    %52 = arith.truncf %51 : vector<16x256xf32> to vector<16x256xbf16>
    %c0_49 = arith.constant 0 : index
    %c0_50 = arith.constant 0 : index
    %53 = vector.load %arg5[%c0_49, %c0_50] : memref<256x256xbf16, #tpu.memory_space<vmem>>, vector<256x256xbf16>
    %cst_51 = arith.constant dense<0.000000e+00> : vector<16x256xf32>
    %54 = tpu.matmul %52, %53, %cst_51 {dimension_numbers = #tpu.dot_dimension_numbers<[1], [0], [0], [1], [0, 0, 1, 1], [], []>} : vector<16x256xbf16>, vector<256x256xbf16>, vector<16x256xf32> -> vector<16x256xf32>
    %55 = arith.addf %54, %15 : vector<16x256xf32>
    %56 = arith.truncf %55 : vector<16x256xf32> to vector<16x256xbf16>
    %c0_52 = arith.constant 0 : index
    %c0_53 = arith.constant 0 : index
    %57 = vector.load %arg5[%c0_52, %c0_53] : memref<256x256xbf16, #tpu.memory_space<vmem>>, vector<256x256xbf16>
    %cst_54 = arith.constant dense<0.000000e+00> : vector<16x256xf32>
    %58 = tpu.matmul %56, %57, %cst_54 {dimension_numbers = #tpu.dot_dimension_numbers<[1], [0], [0], [1], [0, 0, 1, 1], [], []>} : vector<16x256xbf16>, vector<256x256xbf16>, vector<16x256xf32> -> vector<16x256xf32>
    %59 = arith.addf %58, %15 : vector<16x256xf32>
    %c0_55 = arith.constant 0 : index
    %c0_56 = arith.constant 0 : index
    %60 = vector.load %arg4[%c0_55, %c0_56] : memref<16x256xf32, #tpu.memory_space<vmem>>, vector<16x256xf32>
    tpu.vector_store %arg4[%c0_55, %c0_56], %59 {strides = array<i32>} : memref<16x256xf32, #tpu.memory_space<vmem>>, vector<16x256xf32>,
    return
  }
}

</mosaic_0001>

<llo_original>
// kernel: tpu_custom_call.1
$region0: #{tpu_custom_call.1}
  #allocation0 [shape = 'u32[]', space=smem, size = 0x4, offset = 0x4, fixed_abs, tag = 'smem constant byte address 0x4 - core index']
  #allocation1 [shape = 'u32[144,128]{1,0:T(1,128)}', space=vmem, size = 0x12000, scoped, tag = 'internal scratch']
  #allocation2 [shape = 'bf16[256,256]{1,0:T(16,128)(2,1)}', space=vmem, size = 0x20000, scoped, tag = 'scratch operand']
  #allocation3 [shape = 'f32[16,256]{1,0:T(8,128)}', space=vmem, size = 0x4000, scoped, tag = 'scratch operand']
  #allocation4 [shape = 'f32[2,256,128]{2,1,0:T(8,128)}', space=vmem, size = 0x40000, scoped, tag = 'scratch operand']
  #allocation5 [shape = 's32[2]{0}', space=sflag, size = 0x8, scoped, tag = 'scratch operand']
  #allocation8 [shape = 's32[]', space=sflag, size = 0x4, offset = 0, fixed_abs, tag = 'sflag constant byte address 0x0 - dummy sync flag']
  #allocation9 [shape = 's32[]', space=sflag, size = 0x4, offset = 0, fixed_abs, tag = 'sflag constant byte address 0x0 - dummy sync flag']
  %s0 = inlined_call_operand.vmem [shape: f32[256,32], index: 0, kind: input, shape index: {}]
  %s1 = inlined_call_operand.vmem [shape: f32[16,32], index: 1, kind: input, shape index: {}]
  %s2 = inlined_call_operand.vmem [shape: f32[16,1], index: 2, kind: input, shape index: {}]
  %s3 = inlined_call_operand.hbm [shape: f32[256,256], index: 3, kind: input, shape index: {}]
  %s4 = inlined_call_operand.hbm [shape: f32[16,256], index: 4, kind: output, shape index: {}]
  %s5 = sld [smem:[#allocation0]]
  $region22: #{tpu_custom_call.1} parent=0
    _
  %s7 = ssub.s32 1, %s5
  %s8 = scalar_select 0, %s7, %s5
  $region1: #{tpu_custom_call.1} parent=0
    #allocation6 [shape = 'u8[16384]{0}', space=vmem, size = 0x4000, scoped, tag = 'output window, operand 0, single buffered']
    #allocation7 [shape = 's32[1]{0}', space=sflag, size = 0x4, scoped, tag = 'scoped memory for tpu_custom_call.1']
    %9 = vsyncpa [#allocation7], 0
    // Predicated region
    $region2: #{tpu_custom_call.1} parent=1 // pred_check
      _
    $region3: #{tpu_custom_call.1} parent=1 // pred_check_branch
      %11 = sbr.rel (0) target = $region5
    $region4: #{tpu_custom_call.1} parent=1 // pred_region
      _
    $region5: #{tpu_custom_call.1} parent=1 // pred_fallthru
      _
    // Predicated region
    $region6: #{tpu_custom_call.1} parent=1 // pred_check
      _
    $region7: #{tpu_custom_call.1} parent=1 // pred_check_branch
      %13 = sbr.rel (0) target = $region9
    $region8: #{tpu_custom_call.1} parent=1 // pred_region
      _
    $region9: #{tpu_custom_call.1} parent=1 // pred_fallthru
      _
    // Predicated region
    $region10: #{tpu_custom_call.1} parent=1 // pred_check
      _
    $region11: #{tpu_custom_call.1} parent=1 // pred_check_branch
      %15 = sbr.rel (0) target = $region13
    $region12: #{tpu_custom_call.1} parent=1 // pred_region
      _
    $region13: #{tpu_custom_call.1} parent=1 // pred_fallthru
      _
    %s18 = sshll.u32 [#allocation4], 4
    %s19 = int_to_ptr.vmem [resolvable:$true] %s18
    %21 = dma.hbm_to_vmem [thread:$0]  %s3, 4096, %s19, [#allocation5], 256, 128, 8
    %v22 = vld [vmem:[%s1] sm:$0xff]
    %v23 = vld [vmem:[%s1 + $0x8] sm:$0xff]
    %v24 = vpack.c.bf16 %v23, %v22
    %v25 = vld [vmem:[%s0] sm:$0xff]
    %v26 = vld [vmem:[%s0 + $0x8] sm:$0xff]
    %v27 = vld [vmem:[%s0 + $0x10] sm:$0xff]
    %v28 = vld [vmem:[%s0 + $0x18] sm:$0xff]
    %v29 = vld [vmem:[%s0 + $0x20] sm:$0xff]
    %v30 = vld [vmem:[%s0 + $0x28] sm:$0xff]
    %v31 = vld [vmem:[%s0 + $0x30] sm:$0xff]
    %v32 = vld [vmem:[%s0 + $0x38] sm:$0xff]
    %v33 = vld [vmem:[%s0 + $0x40] sm:$0xff]
    %v34 = vld [vmem:[%s0 + $0x48] sm:$0xff]
    %v35 = vld [vmem:[%s0 + $0x50] sm:$0xff]
    %v36 = vld [vmem:[%s0 + $0x58] sm:$0xff]
    %v37 = vld [vmem:[%s0 + $0x60] sm:$0xff]
    %v38 = vld [vmem:[%s0 + $0x68] sm:$0xff]
    %v39 = vld [vmem:[%s0 + $0x70] sm:$0xff]
    %v40 = vld [vmem:[%s0 + $0x78] sm:$0xff]
    %v41 = vld [vmem:[%s0 + $0x80] sm:$0xff]
    %v42 = vld [vmem:[%s0 + $0x88] sm:$0xff]
    %v43 = vld [vmem:[%s0 + $0x90] sm:$0xff]
    %v44 = vld [vmem:[%s0 + $0x98] sm:$0xff]
    %v45 = vld [vmem:[%s0 + $0xa0] sm:$0xff]
    %v46 = vld [vmem:[%s0 + $0xa8] sm:$0xff]
    %v47 = vld [vmem:[%s0 + $0xb0] sm:$0xff]
    %v48 = vld [vmem:[%s0 + $0xb8] sm:$0xff]
    %v49 = vld [vmem:[%s0 + $0xc0] sm:$0xff]
    %v50 = vld [vmem:[%s0 + $0xc8] sm:$0xff]
    %v51 = vld [vmem:[%s0 + $0xd0] sm:$0xff]
    %v52 = vld [vmem:[%s0 + $0xd8] sm:$0xff]
    %v53 = vld [vmem:[%s0 + $0xe0] sm:$0xff]
    %v54 = vld [vmem:[%s0 + $0xe8] sm:$0xff]
    %v55 = vld [vmem:[%s0 + $0xf0] sm:$0xff]
    %v56 = vld [vmem:[%s0 + $0xf8] sm:$0xff]
    %v57 = vpack.c.bf16 %v26, %v25
    %v58 = vpack.c.bf16 %v28, %v27
    %v59 = vpack.c.bf16 %v30, %v29
    %v60 = vpack.c.bf16 %v32, %v31
    %v61 = vpack.c.bf16 %v34, %v33
    %v62 = vpack.c.bf16 %v36, %v35
    %v63 = vpack.c.bf16 %v38, %v37
    %v64 = vpack.c.bf16 %v40, %v39
    %v65 = vpack.c.bf16 %v42, %v41
    %v66 = vpack.c.bf16 %v44, %v43
    %v67 = vpack.c.bf16 %v46, %v45
    %v68 = vpack.c.bf16 %v48, %v47
    %v69 = vpack.c.bf16 %v50, %v49
    %v70 = vpack.c.bf16 %v52, %v51
    %v71 = vpack.c.bf16 %v54, %v53
    %v72 = vpack.c.bf16 %v56, %v55
    %v73 = vld [vmem:[%s2] sm:$0xff]
    %v74 = vld [vmem:[%s2 + $0x8] sm:$0xff]
    %76 = vset.pattern.permute.xlu0 0
    %77 = vperm.xlu0 %76, %v73
    %v78 = vpop.permute.xlu0 %77
    %81 = vset.pattern.permute.xlu0 0
    %82 = vperm.xlu0 %81, %v74
    %v83 = vpop.permute.xlu0 %82
    %vm85 = vcmask 261120
    %v87 = vsel %vm85, %v24, 0
    %v90 = vsel %vm85, %v57, 0
    %v93 = vsel %vm85, %v58, 0
    %v96 = vsel %vm85, %v59, 0
    %v99 = vsel %vm85, %v60, 0
    %v102 = vsel %vm85, %v61, 0
    %v105 = vsel %vm85, %v62, 0
    %v108 = vsel %vm85, %v63, 0
    %v111 = vsel %vm85, %v64, 0
    %v114 = vsel %vm85, %v65, 0
    %v117 = vsel %vm85, %v66, 0
    %v120 = vsel %vm85, %v67, 0
    %v123 = vsel %vm85, %v68, 0
    %v126 = vsel %vm85, %v69, 0
    %v129 = vsel %vm85, %v70, 0
    %v132 = vsel %vm85, %v71, 0
    %v135 = vsel %vm85, %v72, 0
    %137 = vmatprep.subr.bf16.mxu0 0
    %138 = vmatpush1.bf16.xpose.msra.mxu0 %v90
    %139 = vmatprep.subr.bf16.mxu0 0
    %140 = vmatpush1.bf16.xpose.msra.mxu0 %v93
    %141 = vmatprep.subr.bf16.mxu0 0
    %142 = vmatpush1.bf16.xpose.msra.mxu0 %v96
    %143 = vmatprep.subr.bf16.mxu0 0
    %144 = vmatpush1.bf16.xpose.msra.mxu0 %v99
    %145 = vmatprep.subr.bf16.mxu0 0
    %146 = vmatpush1.bf16.xpose.msra.mxu0 %v102
    %147 = vmatprep.subr.bf16.mxu0 0
    %148 = vmatpush1.bf16.xpose.msra.mxu0 %v105
    %149 = vmatprep.subr.bf16.mxu0 0
    %150 = vmatpush1.bf16.xpose.msra.mxu0 %v108
    %151 = vmatprep.subr.bf16.mxu0 0
    %152 = vmatpush1.bf16.xpose.msra.mxu0 %v111
    %153 = vmatprep.subr.bf16.mxu0 0
    %154 = vmatpush1.bf16.xpose.msra.mxu0 %v114
    %155 = vmatprep.subr.bf16.mxu0 0
    %156 = vmatpush1.bf16.xpose.msra.mxu0 %v117
    %157 = vmatprep.subr.bf16.mxu0 0
    %158 = vmatpush1.bf16.xpose.msra.mxu0 %v120
    %159 = vmatprep.subr.bf16.mxu0 0
    %160 = vmatpush1.bf16.xpose.msra.mxu0 %v123
    %161 = vmatprep.subr.bf16.mxu0 0
    %162 = vmatpush1.bf16.xpose.msra.mxu0 %v126
    %163 = vmatprep.subr.bf16.mxu0 0
    %164 = vmatpush1.bf16.xpose.msra.mxu0 %v129
    %165 = vmatprep.subr.bf16.mxu0 0
    %166 = vmatpush1.bf16.xpose.msra.mxu0 %v132
    %167 = vmatprep.subr.bf16.mxu0 0
    %168 = vmatpush1.bf16.xpose.msra.mxu0 %v135
    %169 = vmatprep.mubr.bf16.mxu0 0
    %170 = vmatmul.mubr.bf16.gmra.mrb[0].mxu0 %v87
    %v171 = vpop.f32.mrb[0].mxu0
    %v172 = vadd.f32 %v78, %v171
    %v173 = vpop.f32.mrb[0].mxu0
    %v174 = vadd.f32 %v78, %v173
    %v175 = vpop.f32.mrb[0].mxu0
    %v176 = vadd.f32 %v83, %v175
    %v177 = vpop.f32.mrb[0].mxu0
    %v178 = vadd.f32 %v83, %v177
    %179 = vdwg.mxu0
    %v180 = vmul.f32 %v172, 0.5
    %v181 = vmul.f32 %v174, 0.5
    %v182 = vmul.f32 %v176, 0.5
    %v183 = vmul.f32 %v178, 0.5
    %v184 = vpack.c.bf16 %v176, %v172
    %v185 = vpack.c.bf16 %v178, %v174
    %s186 = scalar_lea.hbm %s3, 128
    %s187 = scalar_lea.vmem [#allocation4], 256
    %s188 = scalar_lea.sflag [#allocation5], 1
    %s190 = sshll.u32 %s187, 4
    %s191 = int_to_ptr.vmem [resolvable:$true] %s190
    %193 = dma.hbm_to_vmem [thread:$0]  %s186, 4096, %s191, %s188, 256, 128, 8
    %s194 = smul.u32 8, 32
    %s195 = smul.u32 %s194, 1
    %s196 = sshll.u32 %s195, 4
    %197 = dma.done [#allocation5], %s196
    %v198 = vld [vmem:[#allocation4] sm:$0xff]
    %v199 = vld [vmem:[#allocation4 + $0x8] sm:$0xff]
    %v200 = vld [vmem:[#allocation4 + $0x10] sm:$0xff]
    %v201 = vld [vmem:[#allocation4 + $0x18] sm:$0xff]
    %v202 = vld [vmem:[#allocation4 + $0x20] sm:$0xff]
    %v203 = vld [vmem:[#allocation4 + $0x28] sm:$0xff]
    %v204 = vld [vmem:[#allocation4 + $0x30] sm:$0xff]
    %v205 = vld [vmem:[#allocation4 + $0x38] sm:$0xff]
    %v206 = vld [vmem:[#allocation4 + $0x40] sm:$0xff]
    %v207 = vld [vmem:[#allocation4 + $0x48] sm:$0xff]
    %v208 = vld [vmem:[#allocation4 + $0x50] sm:$0xff]
    %v209 = vld [vmem:[#allocation4 + $0x58] sm:$0xff]
    %v210 = vld [vmem:[#allocation4 + $0x60] sm:$0xff]
    %v211 = vld [vmem:[#allocation4 + $0x68] sm:$0xff]
    %v212 = vld [vmem:[#allocation4 + $0x70] sm:$0xff]
    %v213 = vld [vmem:[#allocation4 + $0x78] sm:$0xff]
    %v214 = vld [vmem:[#allocation4 + $0x80] sm:$0xff]
    %v215 = vld [vmem:[#allocation4 + $0x88] sm:$0xff]
    %v216 = vld [vmem:[#allocation4 + $0x90] sm:$0xff]
    %v217 = vld [vmem:[#allocation4 + $0x98] sm:$0xff]
    %v218 = vld [vmem:[#allocation4 + $0xa0] sm:$0xff]
    %v219 = vld [vmem:[#allocation4 + $0xa8] sm:$0xff]
    %v220 = vld [vmem:[#allocation4 + $0xb0] sm:$0xff]
    %v221 = vld [vmem:[#allocation4 + $0xb8] sm:$0xff]
    %v222 = vld [vmem:[#allocation4 + $0xc0] sm:$0xff]
    %v223 = vld [vmem:[#allocation4 + $0xc8] sm:$0xff]
    %v224 = vld [vmem:[#allocation4 + $0xd0] sm:$0xff]
    %v225 = vld [vmem:[#allocation4 + $0xd8] sm:$0xff]
    %v226 = vld [vmem:[#allocation4 + $0xe0] sm:$0xff]
    %v227 = vld [vmem:[#allocation4 + $0xe8] sm:$0xff]
    %v228 = vld [vmem:[#allocation4 + $0xf0] sm:$0xff]
    %v229 = vld [vmem:[#allocation4 + $0xf8] sm:$0xff]
    %v230 = vmul.f32 %v198, 0.5
    %v231 = vmul.f32 %v199, 0.5
    %v232 = vmul.f32 %v200, 0.5
    %v233 = vmul.f32 %v201, 0.5
    %v234 = vmul.f32 %v202, 0.5
    %v235 = vmul.f32 %v203, 0.5
    %v236 = vmul.f32 %v204, 0.5
    %v237 = vmul.f32 %v205, 0.5
    %v238 = vmul.f32 %v206, 0.5
    %v239 = vmul.f32 %v207, 0.5
    %v240 = vmul.f32 %v208, 0.5
    %v241 = vmul.f32 %v209, 0.5
    %v242 = vmul.f32 %v210, 0.5
    %v243 = vmul.f32 %v211, 0.5
    %v244 = vmul.f32 %v212, 0.5
    %v245 = vmul.f32 %v213, 0.5
    %v246 = vmul.f32 %v214, 0.5
    %v247 = vmul.f32 %v215, 0.5
    %v248 = vmul.f32 %v216, 0.5
    %v249 = vmul.f32 %v217, 0.5
    %v250 = vmul.f32 %v218, 0.5
    %v251 = vmul.f32 %v219, 0.5
    %v252 = vmul.f32 %v220, 0.5
    %v253 = vmul.f32 %v221, 0.5
    %v254 = vmul.f32 %v222, 0.5
    %v255 = vmul.f32 %v223, 0.5
    %v256 = vmul.f32 %v224, 0.5
    %v257 = vmul.f32 %v225, 0.5
    %v258 = vmul.f32 %v226, 0.5
    %v259 = vmul.f32 %v227, 0.5
    %v260 = vmul.f32 %v228, 0.5
    %v261 = vmul.f32 %v229, 0.5
    %v262 = vpack.c.bf16 %v231, %v230
    %v263 = vpack.c.bf16 %v233, %v232
    %v264 = vpack.c.bf16 %v235, %v234
    %v265 = vpack.c.bf16 %v237, %v236
    %v266 = vpack.c.bf16 %v239, %v238
    %v267 = vpack.c.bf16 %v241, %v240
    %v268 = vpack.c.bf16 %v243, %v242
    %v269 = vpack.c.bf16 %v245, %v244
    %v270 = vpack.c.bf16 %v247, %v246
    %v271 = vpack.c.bf16 %v249, %v248
    %v272 = vpack.c.bf16 %v251, %v250
    %v273 = vpack.c.bf16 %v253, %v252
    %v274 = vpack.c.bf16 %v255, %v254
    %v275 = vpack.c.bf16 %v257, %v256
    %v276 = vpack.c.bf16 %v259, %v258
    %v277 = vpack.c.bf16 %v261, %v260
    %278 = vst [vmem:[#allocation2] sm:$0xff] %v262
    %279 = vst [vmem:[#allocation2 + $0x10] sm:$0xff] %v263
    %280 = vst [vmem:[#allocation2 + $0x20] sm:$0xff] %v264
    %281 = vst [vmem:[#allocation2 + $0x30] sm:$0xff] %v265
    %282 = vst [vmem:[#allocation2 + $0x40] sm:$0xff] %v266
    %283 = vst [vmem:[#allocation2 + $0x50] sm:$0xff] %v267
    %284 = vst [vmem:[#allocation2 + $0x60] sm:$0xff] %v268
    %285 = vst [vmem:[#allocation2 + $0x70] sm:$0xff] %v269
    %286 = vst [vmem:[#allocation2 + $0x80] sm:$0xff] %v270
    %287 = vst [vmem:[#allocation2 + $0x90] sm:$0xff] %v271
    %288 = vst [vmem:[#allocation2 + $0xa0] sm:$0xff] %v272
    %289 = vst [vmem:[#allocation2 + $0xb0] sm:$0xff] %v273
    %290 = vst [vmem:[#allocation2 + $0xc0] sm:$0xff] %v274
    %291 = vst [vmem:[#allocation2 + $0xd0] sm:$0xff] %v275
    %292 = vst [vmem:[#allocation2 + $0xe0] sm:$0xff] %v276
    %293 = vst [vmem:[#allocation2 + $0xf0] sm:$0xff] %v277
    %v294 = vld [vmem:[#allocation2] sm:$0xff]
    %v295 = vld [vmem:[#allocation2 + $0x10] sm:$0xff]
    %v296 = vld [vmem:[#allocation2 + $0x20] sm:$0xff]
    %v297 = vld [vmem:[#allocation2 + $0x30] sm:$0xff]
    %v298 = vld [vmem:[#allocation2 + $0x40] sm:$0xff]
    %v299 = vld [vmem:[#allocation2 + $0x50] sm:$0xff]
    %v300 = vld [vmem:[#allocation2 + $0x60] sm:$0xff]
    %v301 = vld [vmem:[#allocation2 + $0x70] sm:$0xff]
    %v302 = vld [vmem:[#allocation2 + $0x80] sm:$0xff]
    %v303 = vld [vmem:[#allocation2 + $0x90] sm:$0xff]
    %v304 = vld [vmem:[#allocation2 + $0xa0] sm:$0xff]
    %v305 = vld [vmem:[#allocation2 + $0xb0] sm:$0xff]
    %v306 = vld [vmem:[#allocation2 + $0xc0] sm:$0xff]
    %v307 = vld [vmem:[#allocation2 + $0xd0] sm:$0xff]
    %v308 = vld [vmem:[#allocation2 + $0xe0] sm:$0xff]
    %v309 = vld [vmem:[#allocation2 + $0xf0] sm:$0xff]
    %310 = vmatprep.subr.bf16.mxu0 0
    %311 = vmatpush1.bf16.msra.mxu0 %v294
    %312 = vmatprep.subr.bf16.mxu0 0
    %313 = vmatpush1.bf16.msra.mxu0 %v295
    %314 = vmatprep.subr.bf16.mxu0 0
    %315 = vmatpush1.bf16.msra.mxu0 %v296
    %316 = vmatprep.subr.bf16.mxu0 0
    %317 = vmatpush1.bf16.msra.mxu0 %v297
    %318 = vmatprep.subr.bf16.mxu0 0
    %319 = vmatpush1.bf16.msra.mxu0 %v298
    %320 = vmatprep.subr.bf16.mxu0 0
    %321 = vmatpush1.bf16.msra.mxu0 %v299
    %322 = vmatprep.subr.bf16.mxu0 0
    %323 = vmatpush1.bf16.msra.mxu0 %v300
    %324 = vmatprep.subr.bf16.mxu0 0
    %325 = vmatpush1.bf16.msra.mxu0 %v301
    %326 = vmatprep.subr.bf16.mxu0 0
    %327 = vmatpush1.bf16.msra.mxu0 %v302
    %328 = vmatprep.subr.bf16.mxu0 0
    %329 = vmatpush1.bf16.msra.mxu0 %v303
    %330 = vmatprep.subr.bf16.mxu0 0
    %331 = vmatpush1.bf16.msra.mxu0 %v304
    %332 = vmatprep.subr.bf16.mxu0 0
    %333 = vmatpush1.bf16.msra.mxu0 %v305
    %334 = vmatprep.subr.bf16.mxu0 0
    %335 = vmatpush1.bf16.msra.mxu0 %v306
    %336 = vmatprep.subr.bf16.mxu0 0
    %337 = vmatpush1.bf16.msra.mxu0 %v307
    %338 = vmatprep.subr.bf16.mxu0 0
    %339 = vmatpush1.bf16.msra.mxu0 %v308
    %340 = vmatprep.subr.bf16.mxu0 0
    %341 = vmatpush1.bf16.msra.mxu0 %v309
    %342 = vmatprep.mubr.bf16.mxu0 %v185
    %343 = vmatmul.mubr.bf16.gmra.mrb[0].mxu0 %v184
    %v344 = vpop.f32.mrb[0].mxu0
    %v345 = vadd.f32 0.0, %v344
    %v346 = vpop.f32.mrb[0].mxu0
    %v347 = vpop.f32.mrb[0].mxu0
    %v348 = vadd.f32 0.0, %v347
    %v349 = vpop.f32.mrb[0].mxu0
    %350 = vdwg.mxu0
    %351 = vst [vmem:[#allocation3] sm:$0xff] %v345
    %352 = vst [vmem:[#allocation3 + $0x10] sm:$0xff] %v348
    %s353 = sshll.u32 %s195, 4
    %354 = dma.done %s188, %s353
    %v355 = vld [vmem:[%s187] sm:$0xff]
    %v356 = vld [vmem:[%s187 + $0x8] sm:$0xff]
    %v357 = vld [vmem:[%s187 + $0x10] sm:$0xff]
    %v358 = vld [vmem:[%s187 + $0x18] sm:$0xff]
    %v359 = vld [vmem:[%s187 + $0x20] sm:$0xff]
    %v360 = vld [vmem:[%s187 + $0x28] sm:$0xff]
    %v361 = vld [vmem:[%s187 + $0x30] sm:$0xff]
    %v362 = vld [vmem:[%s187 + $0x38] sm:$0xff]
    %v363 = vld [vmem:[%s187 + $0x40] sm:$0xff]
    %v364 = vld [vmem:[%s187 + $0x48] sm:$0xff]
    %v365 = vld [vmem:[%s187 + $0x50] sm:$0xff]
    %v366 = vld [vmem:[%s187 + $0x58] sm:$0xff]
    %v367 = vld [vmem:[%s187 + $0x60] sm:$0xff]
    %v368 = vld [vmem:[%s187 + $0x68] sm:$0xff]
    %v369 = vld [vmem:[%s187 + $0x70] sm:$0xff]
    %v370 = vld [vmem:[%s187 + $0x78] sm:$0xff]
    %v371 = vld [vmem:[%s187 + $0x80] sm:$0xff]
    %v372 = vld [vmem:[%s187 + $0x88] sm:$0xff]
    %v373 = vld [vmem:[%s187 + $0x90] sm:$0xff]
    %v374 = vld [vmem:[%s187 + $0x98] sm:$0xff]
    %v375 = vld [vmem:[%s187 + $0xa0] sm:$0xff]
    %v376 = vld [vmem:[%s187 + $0xa8] sm:$0xff]
    %v377 = vld [vmem:[%s187 + $0xb0] sm:$0xff]
    %v378 = vld [vmem:[%s187 + $0xb8] sm:$0xff]
    %v379 = vld [vmem:[%s187 + $0xc0] sm:$0xff]
    %v380 = vld [vmem:[%s187 + $0xc8] sm:$0xff]
    %v381 = vld [vmem:[%s187 + $0xd0] sm:$0xff]
    %v382 = vld [vmem:[%s187 + $0xd8] sm:$0xff]
    %v383 = vld [vmem:[%s187 + $0xe0] sm:$0xff]
    %v384 = vld [vmem:[%s187 + $0xe8] sm:$0xff]
    %v385 = vld [vmem:[%s187 + $0xf0] sm:$0xff]
    %v386 = vld [vmem:[%s187 + $0xf8] sm:$0xff]
    %v387 = vmul.f32 %v355, 0.5
    %v388 = vmul.f32 %v356, 0.5
    %v389 = vmul.f32 %v357, 0.5
    %v390 = vmul.f32 %v358, 0.5
    %v391 = vmul.f32 %v359, 0.5
    %v392 = vmul.f32 %v360, 0.5
    %v393 = vmul.f32 %v361, 0.5
    %v394 = vmul.f32 %v362, 0.5
    %v395 = vmul.f32 %v363, 0.5
    %v396 = vmul.f32 %v364, 0.5
    %v397 = vmul.f32 %v365, 0.5
    %v398 = vmul.f32 %v366, 0.5
    %v399 = vmul.f32 %v367, 0.5
    %v400 = vmul.f32 %v368, 0.5
    %v401 = vmul.f32 %v369, 0.5
    %v402 = vmul.f32 %v370, 0.5
    %v403 = vmul.f32 %v371, 0.5
    %v404 = vmul.f32 %v372, 0.5
    %v405 = vmul.f32 %v373, 0.5
    %v406 = vmul.f32 %v374, 0.5
    %v407 = vmul.f32 %v375, 0.5
    %v408 = vmul.f32 %v376, 0.5
    %v409 = vmul.f32 %v377, 0.5
    %v410 = vmul.f32 %v378, 0.5
    %v411 = vmul.f32 %v379, 0.5
    %v412 = vmul.f32 %v380, 0.5
    %v413 = vmul.f32 %v381, 0.5
    %v414 = vmul.f32 %v382, 0.5
    %v415 = vmul.f32 %v383, 0.5
    %v416 = vmul.f32 %v384, 0.5
    %v417 = vmul.f32 %v385, 0.5
    %v418 = vmul.f32 %v386, 0.5
    %v419 = vpack.c.bf16 %v388, %v387
    %v420 = vpack.c.bf16 %v390, %v389
    %v421 = vpack.c.bf16 %v392, %v391
    %v422 = vpack.c.bf16 %v394, %v393
    %v423 = vpack.c.bf16 %v396, %v395
    %v424 = vpack.c.bf16 %v398, %v397
    %v425 = vpack.c.bf16 %v400, %v399
    %v426 = vpack.c.bf16 %v402, %v401
    %v427 = vpack.c.bf16 %v404, %v403
    %v428 = vpack.c.bf16 %v406, %v405
    %v429 = vpack.c.bf16 %v408, %v407
    %v430 = vpack.c.bf16 %v410, %v409
    %v431 = vpack.c.bf16 %v412, %v411
    %v432 = vpack.c.bf16 %v414, %v413
    %v433 = vpack.c.bf16 %v416, %v415
    %v434 = vpack.c.bf16 %v418, %v417
    %435 = vst [vmem:[#allocation2 + $0x8] sm:$0xff] %v419
    %436 = vst [vmem:[#allocation2 + $0x18] sm:$0xff] %v420
    %437 = vst [vmem:[#allocation2 + $0x28] sm:$0xff] %v421
    %438 = vst [vmem:[#allocation2 + $0x38] sm:$0xff] %v422
    %439 = vst [vmem:[#allocation2 + $0x48] sm:$0xff] %v423
    %440 = vst [vmem:[#allocation2 + $0x58] sm:$0xff] %v424
    %441 = vst [vmem:[#allocation2 + $0x68] sm:$0xff] %v425
    %442 = vst [vmem:[#allocation2 + $0x78] sm:$0xff] %v426
    %443 = vst [vmem:[#allocation2 + $0x88] sm:$0xff] %v427
    %444 = vst [vmem:[#allocation2 + $0x98] sm:$0xff] %v428
    %445 = vst [vmem:[#allocation2 + $0xa8] sm:$0xff] %v429
    %446 = vst [vmem:[#allocation2 + $0xb8] sm:$0xff] %v430
    %447 = vst [vmem:[#allocation2 + $0xc8] sm:$0xff] %v431
    %448 = vst [vmem:[#allocation2 + $0xd8] sm:$0xff] %v432
    %449 = vst [vmem:[#allocation2 + $0xe8] sm:$0xff] %v433
    %450 = vst [vmem:[#allocation2 + $0xf8] sm:$0xff] %v434
    %v451 = vld [vmem:[#allocation2 + $0x8] sm:$0xff]
    %v452 = vld [vmem:[#allocation2 + $0x18] sm:$0xff]
    %v453 = vld [vmem:[#allocation2 + $0x28] sm:$0xff]
    %v454 = vld [vmem:[#allocation2 + $0x38] sm:$0xff]
    %v455 = vld [vmem:[#allocation2 + $0x48] sm:$0xff]
    %v456 = vld [vmem:[#allocation2 + $0x58] sm:$0xff]
    %v457 = vld [vmem:[#allocation2 + $0x68] sm:$0xff]
    %v458 = vld [vmem:[#allocation2 + $0x78] sm:$0xff]
    %v459 = vld [vmem:[#allocation2 + $0x88] sm:$0xff]
    %v460 = vld [vmem:[#allocation2 + $0x98] sm:$0xff]
    %v461 = vld [vmem:[#allocation2 + $0xa8] sm:$0xff]
    %v462 = vld [vmem:[#allocation2 + $0xb8] sm:$0xff]
    %v463 = vld [vmem:[#allocation2 + $0xc8] sm:$0xff]
    %v464 = vld [vmem:[#allocation2 + $0xd8] sm:$0xff]
    %v465 = vld [vmem:[#allocation2 + $0xe8] sm:$0xff]
    %v466 = vld [vmem:[#allocation2 + $0xf8] sm:$0xff]
    %467 = vmatprep.subr.bf16.mxu0 0
    %468 = vmatpush1.bf16.msra.mxu0 %v451
    %469 = vmatprep.subr.bf16.mxu0 0
    %470 = vmatpush1.bf16.msra.mxu0 %v452
    %471 = vmatprep.subr.bf16.mxu0 0
    %472 = vmatpush1.bf16.msra.mxu0 %v453
    %473 = vmatprep.subr.bf16.mxu0 0
    %474 = vmatpush1.bf16.msra.mxu0 %v454
    %475 = vmatprep.subr.bf16.mxu0 0
    %476 = vmatpush1.bf16.msra.mxu0 %v455
    %477 = vmatprep.subr.bf16.mxu0 0
    %478 = vmatpush1.bf16.msra.mxu0 %v456
    %479 = vmatprep.subr.bf16.mxu0 0
    %480 = vmatpush1.bf16.msra.mxu0 %v457
    %481 = vmatprep.subr.bf16.mxu0 0
    %482 = vmatpush1.bf16.msra.mxu0 %v458
    %483 = vmatprep.subr.bf16.mxu0 0
    %484 = vmatpush1.bf16.msra.mxu0 %v459
    %485 = vmatprep.subr.bf16.mxu0 0
    %486 = vmatpush1.bf16.msra.mxu0 %v460
    %487 = vmatprep.subr.bf16.mxu0 0
    %488 = vmatpush1.bf16.msra.mxu0 %v461
    %489 = vmatprep.subr.bf16.mxu0 0
    %490 = vmatpush1.bf16.msra.mxu0 %v462
    %491 = vmatprep.subr.bf16.mxu0 0
    %492 = vmatpush1.bf16.msra.mxu0 %v463
    %493 = vmatprep.subr.bf16.mxu0 0
    %494 = vmatpush1.bf16.msra.mxu0 %v464
    %495 = vmatprep.subr.bf16.mxu0 0
    %496 = vmatpush1.bf16.msra.mxu0 %v465
    %497 = vmatprep.subr.bf16.mxu0 0
    %498 = vmatpush1.bf16.msra.mxu0 %v466
    %499 = vmatprep.mubr.bf16.mxu0 %v185
    %500 = vmatmul.mubr.bf16.gmra.mrb[0].mxu0 %v184
    %v501 = vpop.f32.mrb[0].mxu0
    %v502 = vadd.f32 0.0, %v501
    %v503 = vpop.f32.mrb[0].mxu0
    %v504 = vpop.f32.mrb[0].mxu0
    %v505 = vadd.f32 0.0, %v504
    %v506 = vpop.f32.mrb[0].mxu0
    %507 = vdwg.mxu0
    %508 = vst [vmem:[#allocation3 + $0x8] sm:$0xff] %v502
    %509 = vst [vmem:[#allocation3 + $0x18] sm:$0xff] %v505
    %v510 = vld [vmem:[#allocation3] sm:$0xff]
    %v511 = vld [vmem:[#allocation3 + $0x8] sm:$0xff]
    %v512 = vld [vmem:[#allocation3 + $0x10] sm:$0xff]
    %v513 = vld [vmem:[#allocation3 + $0x18] sm:$0xff]
    %v514 = vadd.f32 %v510, %v180
    %v515 = vadd.f32 %v511, %v181
    %v516 = vadd.f32 %v512, %v182
    %v517 = vadd.f32 %v513, %v183
    %v518 = vpack.c.bf16 %v516, %v514
    %v519 = vpack.c.bf16 %v517, %v515
    %v520 = vld [vmem:[#allocation2] sm:$0xff]
    %v521 = vld [vmem:[#allocation2 + $0x8] sm:$0xff]
    %v522 = vld [vmem:[#allocation2 + $0x10] sm:$0xff]
    %v523 = vld [vmem:[#allocation2 + $0x18] sm:$0xff]
    %v524 = vld [vmem:[#allocation2 + $0x20] sm:$0xff]
    %v525 = vld [vmem:[#allocation2 + $0x28] sm:$0xff]
    %v526 = vld [vmem:[#allocation2 + $0x30] sm:$0xff]
    %v527 = vld [vmem:[#allocation2 + $0x38] sm:$0xff]
    %v528 = vld [vmem:[#allocation2 + $0x40] sm:$0xff]
    %v529 = vld [vmem:[#allocation2 + $0x48] sm:$0xff]
    %v530 = vld [vmem:[#allocation2 + $0x50] sm:$0xff]
    %v531 = vld [vmem:[#allocation2 + $0x58] sm:$0xff]
    %v532 = vld [vmem:[#allocation2 + $0x60] sm:$0xff]
    %v533 = vld [vmem:[#allocation2 + $0x68] sm:$0xff]
    %v534 = vld [vmem:[#allocation2 + $0x70] sm:$0xff]
    %v535 = vld [vmem:[#allocation2 + $0x78] sm:$0xff]
    %v536 = vld [vmem:[#allocation2 + $0x80] sm:$0xff]
    %v537 = vld [vmem:[#allocation2 + $0x88] sm:$0xff]
    %v538 = vld [vmem:[#allocation2 + $0x90] sm:$0xff]
    %v539 = vld [vmem:[#allocation2 + $0x98] sm:$0xff]
    %v540 = vld [vmem:[#allocation2 + $0xa0] sm:$0xff]
    %v541 = vld [vmem:[#allocation2 + $0xa8] sm:$0xff]
    %v542 = vld [vmem:[#allocation2 + $0xb0] sm:$0xff]
    %v543 = vld [vmem:[#allocation2 + $0xb8] sm:$0xff]
    %v544 = vld [vmem:[#allocation2 + $0xc0] sm:$0xff]
    %v545 = vld [vmem:[#allocation2 + $0xc8] sm:$0xff]
    %v546 = vld [vmem:[#allocation2 + $0xd0] sm:$0xff]
    %v547 = vld [vmem:[#allocation2 + $0xd8] sm:$0xff]
    %v548 = vld [vmem:[#allocation2 + $0xe0] sm:$0xff]
    %v549 = vld [vmem:[#allocation2 + $0xe8] sm:$0xff]
    %v550 = vld [vmem:[#allocation2 + $0xf0] sm:$0xff]
    %v551 = vld [vmem:[#allocation2 + $0xf8] sm:$0xff]
    %552 = vmatprep.subr.bf16.mxu0 %v521
    %553 = vmatpush1.bf16.msra.mxu0 %v520
    %554 = vmatprep.subr.bf16.mxu0 %v523
    %555 = vmatpush1.bf16.msra.mxu0 %v522
    %556 = vmatprep.subr.bf16.mxu0 %v525
    %557 = vmatpush1.bf16.msra.mxu0 %v524
    %558 = vmatprep.subr.bf16.mxu0 %v527
    %559 = vmatpush1.bf16.msra.mxu0 %v526
    %560 = vmatprep.subr.bf16.mxu0 %v529
    %561 = vmatpush1.bf16.msra.mxu0 %v528
    %562 = vmatprep.subr.bf16.mxu0 %v531
    %563 = vmatpush1.bf16.msra.mxu0 %v530
    %564 = vmatprep.subr.bf16.mxu0 %v533
    %565 = vmatpush1.bf16.msra.mxu0 %v532
    %566 = vmatprep.subr.bf16.mxu0 %v535
    %567 = vmatpush1.bf16.msra.mxu0 %v534
    %568 = vmatprep.subr.bf16.mxu0 %v537
    %569 = vmatpush1.bf16.msra.mxu0 %v536
    %570 = vmatprep.subr.bf16.mxu0 %v539
    %571 = vmatpush1.bf16.msra.mxu0 %v538
    %572 = vmatprep.subr.bf16.mxu0 %v541
    %573 = vmatpush1.bf16.msra.mxu0 %v540
    %574 = vmatprep.subr.bf16.mxu0 %v543
    %575 = vmatpush1.bf16.msra.mxu0 %v542
    %576 = vmatprep.subr.bf16.mxu0 %v545
    %577 = vmatpush1.bf16.msra.mxu0 %v544
    %578 = vmatprep.subr.bf16.mxu0 %v547
    %579 = vmatpush1.bf16.msra.mxu0 %v546
    %580 = vmatprep.subr.bf16.mxu0 %v549
    %581 = vmatpush1.bf16.msra.mxu0 %v548
    %582 = vmatprep.subr.bf16.mxu0 %v551
    %583 = vmatpush1.bf16.msra.mxu0 %v550
    %584 = vmatprep.mubr.bf16.mxu0 %v519
    %585 = vmatmul.mubr.bf16.gmra.mrb[0].mxu0 %v518
    %v586 = vpop.f32.mrb[0].mxu0
    %v587 = vadd.f32 %v180, %v586
    %v588 = vpop.f32.mrb[0].mxu0
    %v589 = vadd.f32 %v181, %v588
    %v590 = vpop.f32.mrb[0].mxu0
    %v591 = vadd.f32 %v182, %v590
    %v592 = vpop.f32.mrb[0].mxu0
    %v593 = vadd.f32 %v183, %v592
    %594 = vdwg.mxu0
    %v595 = vpack.c.bf16 %v591, %v587
    %v596 = vpack.c.bf16 %v593, %v589
    %597 = vmatprep.subr.bf16.mxu0 %v521
    %598 = vmatpush1.bf16.msra.mxu0 %v520
    %599 = vmatprep.subr.bf16.mxu0 %v523
    %600 = vmatpush1.bf16.msra.mxu0 %v522
    %601 = vmatprep.subr.bf16.mxu0 %v525
    %602 = vmatpush1.bf16.msra.mxu0 %v524
    %603 = vmatprep.subr.bf16.mxu0 %v527
    %604 = vmatpush1.bf16.msra.mxu0 %v526
    %605 = vmatprep.subr.bf16.mxu0 %v529
    %606 = vmatpush1.bf16.msra.mxu0 %v528
    %607 = vmatprep.subr.bf16.mxu0 %v531
    %608 = vmatpush1.bf16.msra.mxu0 %v530
    %609 = vmatprep.subr.bf16.mxu0 %v533
    %610 = vmatpush1.bf16.msra.mxu0 %v532
    %611 = vmatprep.subr.bf16.mxu0 %v535
    %612 = vmatpush1.bf16.msra.mxu0 %v534
    %613 = vmatprep.subr.bf16.mxu0 %v537
    %614 = vmatpush1.bf16.msra.mxu0 %v536
    %615 = vmatprep.subr.bf16.mxu0 %v539
    %616 = vmatpush1.bf16.msra.mxu0 %v538
    %617 = vmatprep.subr.bf16.mxu0 %v541
    %618 = vmatpush1.bf16.msra.mxu0 %v540
    %619 = vmatprep.subr.bf16.mxu0 %v543
    %620 = vmatpush1.bf16.msra.mxu0 %v542
    %621 = vmatprep.subr.bf16.mxu0 %v545
    %622 = vmatpush1.bf16.msra.mxu0 %v544
    %623 = vmatprep.subr.bf16.mxu0 %v547
    %624 = vmatpush1.bf16.msra.mxu0 %v546
    %625 = vmatprep.subr.bf16.mxu0 %v549
    %626 = vmatpush1.bf16.msra.mxu0 %v548
    %627 = vmatprep.subr.bf16.mxu0 %v551
    %628 = vmatpush1.bf16.msra.mxu0 %v550
    %629 = vmatprep.mubr.bf16.mxu0 %v596
    %630 = vmatmul.mubr.bf16.gmra.mrb[0].mxu0 %v595
    %v631 = vpop.f32.mrb[0].mxu0
    %v632 = vadd.f32 %v180, %v631
    %v633 = vpop.f32.mrb[0].mxu0
    %v634 = vadd.f32 %v181, %v633
    %v635 = vpop.f32.mrb[0].mxu0
    %v636 = vadd.f32 %v182, %v635
    %v637 = vpop.f32.mrb[0].mxu0
    %v638 = vadd.f32 %v183, %v637
    %639 = vdwg.mxu0
    %640 = vst [vmem:[#allocation6] sm:$0xff] %v632
    %641 = vst [vmem:[#allocation6 + $0x8] sm:$0xff] %v634
    %642 = vst [vmem:[#allocation6 + $0x10] sm:$0xff] %v636
    %643 = vst [vmem:[#allocation6 + $0x18] sm:$0xff] %v638
    // Predicated region
    $region14: #{tpu_custom_call.1} parent=1 // pred_check
      _
    $region15: #{tpu_custom_call.1} parent=1 // pred_check_branch
      %645 = sbr.rel (0) target = $region17
    $region16: #{tpu_custom_call.1} parent=1 // pred_region
      %s647 = ssub.s32 512, 512
      %648 = vsyncadd [#allocation7], %s647
      %s649 = sshll.u32 [#allocation6], 4
      %s650 = int_to_ptr.vmem [resolvable:$true] %s649
      %655 = dma.vmem_to_hbm [thread:$0]  %s650, 512, %s4, [#allocation7], 256, 256, 16
    $region17: #{tpu_custom_call.1} parent=1 // pred_fallthru
      _
    // Predicated region
    $region18: #{tpu_custom_call.1} parent=1 // pred_check
      _
    $region19: #{tpu_custom_call.1} parent=1 // pred_check_branch
      %657 = sbr.rel (0) target = $region21
    $region20: #{tpu_custom_call.1} parent=1 // pred_region
      %658 = dma.done [#allocation7], 512
    $region21: #{tpu_custom_call.1} parent=1 // pred_fallthru
      _
    %659 = vsyncpa [#allocation7], 1
  %660 = vsyncmov [#allocation5]
  %s661 = vpop.sfrf %660
  %p662 = scmp.eq.s32.totalorder %s661, 0
  %p663 = pneg %p662
  %665 = shalt.err (%p663)
  %s666 = scalar_lea.sflag [#allocation5], 1
  %667 = vsyncmov %s666
  %s668 = vpop.sfrf %667
  %p669 = scmp.eq.s32.totalorder %s668, 0
  %p670 = pneg %p669
  %672 = shalt.err (%p670)

</llo_original>
